<compile_context>
chip_gen: v6e
topology: v6e:2x2x1
jax: 0.10.0
libtpu: 0.0.40
codegen_flags: <defaults>
</compile_context>

<pallas_src>
import jax
import jax.numpy as jnp
from jax.experimental import pallas as pl
from jax.experimental.pallas import tpu as pltpu

IN_DIM = 60
HIDDEN = 256
OUT_DIM = 10
IN_PAD = 64     # K padded to a multiple of 8 sublanes (zero-filled)
OUT_PAD = 128   # output padded to a full 128-lane vreg -> unmasked stores


def fcnn_kernel(x_ref, w1_ref, b1_ref, w2_ref, b2_ref, o_ref):
    # fc1 on the MXU (bf16 operands, f32 accumulation); bias + ReLU in f32 (VPU).
    h = jnp.dot(x_ref[...], w1_ref[...], preferred_element_type=jnp.float32)
    h = jnp.maximum(h + b1_ref[...], 0.0)                    # (TB, 256) f32
    # fc2: cast activations back to the streamed dtype for the MXU.
    y = jnp.dot(h.astype(w2_ref.dtype), w2_ref[...],
                preferred_element_type=jnp.float32)
    o_ref[...] = (y + b2_ref[...]).astype(o_ref.dtype)       # (TB, 128) lane-dense


def fcnn_forward(x, w1, b1, w2, b2, *, block_b=512, stream_dtype=jnp.bfloat16):
    """y = relu(x @ W1 + b1) @ W2 + b2 with W1:(60,256), W2:(256,10)."""
    B = x.shape[0]

    # ---- one-time layout prep in the wrapper (cheap, outside the kernel) ----
    # Pad K: 60 -> 64 (zero cols of x / zero rows of W1: numerically identical).
    x_p = jnp.pad(x, ((0, 0), (0, IN_PAD - IN_DIM))).astype(stream_dtype)
    w1_p = jnp.pad(w1, ((0, IN_PAD - IN_DIM), (0, 0))).astype(stream_dtype)
    # Pad N_out: 10 -> 128 so every output store is a full-lane vst (no vst.msk).
    w2_p = jnp.pad(w2, ((0, 0), (0, OUT_PAD - OUT_DIM))).astype(stream_dtype)
    b1_2d = b1.reshape(1, HIDDEN).astype(jnp.float32)
    b2_2d = jnp.pad(b2, (0, OUT_PAD - OUT_DIM)).reshape(1, OUT_PAD).astype(jnp.float32)

    # ---- batch tiling: TB multiple of 8, capped at block_b (sweepable) ----
    b8 = ((B + 7) // 8) * 8
    tb = min(block_b, b8)
    b_pad = ((b8 + tb - 1) // tb) * tb
    if b_pad != B:
        x_p = jnp.pad(x_p, ((0, b_pad - B), (0, 0)))
    grid = (b_pad // tb,)

    stream_bytes = jnp.dtype(stream_dtype).itemsize
    cost = pl.CostEstimate(
        flops=2 * b_pad * (IN_PAD * HIDDEN + HIDDEN * OUT_PAD),
        transcendentals=0,
        bytes_accessed=(b_pad * IN_PAD + IN_PAD * HIDDEN + HIDDEN * OUT_PAD) * stream_bytes
        + (HIDDEN + OUT_PAD) * 4                     # biases (f32)
        + b_pad * OUT_PAD * 4,                       # output (f32)
    )

    out = pl.pallas_call(
        fcnn_kernel,
        out_shape=jax.ShapeDtypeStruct((b_pad, OUT_PAD), jnp.float32),
        grid=grid,
        in_specs=[
            pl.BlockSpec((tb, IN_PAD), lambda i: (i, 0)),       # streamed x tiles
            pl.BlockSpec((IN_PAD, HIDDEN), lambda i: (0, 0)),   # resident W1
            pl.BlockSpec((1, HIDDEN), lambda i: (0, 0)),        # resident b1
            pl.BlockSpec((HIDDEN, OUT_PAD), lambda i: (0, 0)),  # resident W2 (padded)
            pl.BlockSpec((1, OUT_PAD), lambda i: (0, 0)),       # resident b2 (padded)
        ],
        out_specs=pl.BlockSpec((tb, OUT_PAD), lambda i: (i, 0)),
        compiler_params=pltpu.CompilerParams(
            dimension_semantics=("parallel",)),                 # megacore on v7x
        cost_estimate=cost,
    )(x_p, w1_p, b1_2d, w2_p, b2_2d)

    return out[:B, :OUT_DIM]


def init_params(key):
    """Deterministic init mirroring nn.Linear's U(-1/sqrt(fan_in), 1/sqrt(fan_in))."""
    k1, k2, k3, k4 = jax.random.split(key, 4)
    bound1 = 1.0 / jnp.sqrt(IN_DIM)
    bound2 = 1.0 / jnp.sqrt(HIDDEN)
    # stored as (in, out) = transpose of PyTorch's (out, in)
    w1 = jax.random.uniform(k1, (IN_DIM, HIDDEN), jnp.float32, -bound1, bound1)
    b1 = jax.random.uniform(k2, (HIDDEN,), jnp.float32, -bound1, bound1)
    w2 = jax.random.uniform(k3, (HIDDEN, OUT_DIM), jnp.float32, -bound2, bound2)
    b2 = jax.random.uniform(k4, (OUT_DIM,), jnp.float32, -bound2, bound2)
    return w1, b1, w2, b2


if __name__ == "__main__":
    key = jax.random.PRNGKey(0)
    kx, kp = jax.random.split(key)
    B = 2
    x = jax.random.normal(kx, (B, IN_DIM), jnp.float32)
    w1, b1, w2, b2 = init_params(kp)

    out = fcnn_forward(x, w1, b1, w2, b2)
    jax.block_until_ready(out)

    # Reference check in plain f32 JAX (bf16-streamed operands => modest tolerance).
    ref = jnp.maximum(x @ w1 + b1, 0.0) @ w2 + b2
    assert out.shape == (B, OUT_DIM)
    assert jnp.allclose(out, ref, atol=2e-2, rtol=2e-2), (
        f"max abs err {jnp.max(jnp.abs(out - ref))}")
    print("KERNEL_OK")
</pallas_src>

<mosaic_0001>
module attributes {stable_mosaic.version = 11 : i64} {
  func.func @fcnn_kernel(%arg0: i32, %arg1: memref<8x64xbf16, #tpu.memory_space<vmem>>, %arg2: memref<64x256xbf16, #tpu.memory_space<vmem>>, %arg3: memref<1x256xf32, #tpu.memory_space<vmem>>, %arg4: memref<256x128xbf16, #tpu.memory_space<vmem>>, %arg5: memref<1x128xf32, #tpu.memory_space<vmem>>, %arg6: memref<8x128xf32, #tpu.memory_space<vmem>>) attributes {dimension_semantics = [#tpu.dimension_semantics<parallel>], iteration_bounds = array<i64: 1>, scalar_prefetch = 0 : i64, scratch_operands = 0 : i64, tpu.core_type = #tpu.core_type<tc>, window_params = [{transform_indices = @transform_0, window_bounds = array<i64: 8, 64>}, {pipeline_mode = #tpu.pipeline_mode<synchronous>, transform_indices = @transform_1, window_bounds = array<i64: 64, 256>}, {pipeline_mode = #tpu.pipeline_mode<synchronous>, transform_indices = @transform_2, window_bounds = array<i64: 1, 256>}, {pipeline_mode = #tpu.pipeline_mode<synchronous>, transform_indices = @transform_3, window_bounds = array<i64: 256, 128>}, {pipeline_mode = #tpu.pipeline_mode<synchronous>, transform_indices = @transform_4, window_bounds = array<i64: 1, 128>}, {transform_indices = @transform_5, window_bounds = array<i64: 8, 128>}]} {
    %c0 = arith.constant 0 : index
    %c0_0 = arith.constant 0 : index
    %0 = vector.load %arg1[%c0, %c0_0] : memref<8x64xbf16, #tpu.memory_space<vmem>>, vector<8x64xbf16>
    %c0_1 = arith.constant 0 : index
    %c0_2 = arith.constant 0 : index
    %1 = vector.load %arg2[%c0_1, %c0_2] : memref<64x256xbf16, #tpu.memory_space<vmem>>, vector<64x256xbf16>
    %cst = arith.constant dense<0.000000e+00> : vector<8x256xf32>
    %2 = tpu.matmul %0, %1, %cst {dimension_numbers = #tpu.dot_dimension_numbers<[1], [0], [0], [1], [0, 0, 1, 1], [], []>} : vector<8x64xbf16>, vector<64x256xbf16>, vector<8x256xf32> -> vector<8x256xf32>
    %c0_3 = arith.constant 0 : index
    %c0_4 = arith.constant 0 : index
    %3 = vector.load %arg3[%c0_3, %c0_4] : memref<1x256xf32, #tpu.memory_space<vmem>>, vector<1x256xf32>
    %4 = vector.broadcast %3 : vector<1x256xf32> to vector<8x256xf32>
    %5 = arith.addf %2, %4 : vector<8x256xf32>
    %cst_5 = arith.constant 0.000000e+00 : f32
    %6 = vector.broadcast %cst_5 : f32 to vector<8x256xf32>
    %7 = arith.maximumf %5, %6 : vector<8x256xf32>
    %8 = arith.truncf %7 : vector<8x256xf32> to vector<8x256xbf16>
    %c0_6 = arith.constant 0 : index
    %c0_7 = arith.constant 0 : index
    %9 = vector.load %arg4[%c0_6, %c0_7] : memref<256x128xbf16, #tpu.memory_space<vmem>>, vector<256x128xbf16>
    %cst_8 = arith.constant dense<0.000000e+00> : vector<8x128xf32>
    %10 = tpu.matmul %8, %9, %cst_8 {dimension_numbers = #tpu.dot_dimension_numbers<[1], [0], [0], [1], [0, 0, 1, 1], [], []>} : vector<8x256xbf16>, vector<256x128xbf16>, vector<8x128xf32> -> vector<8x128xf32>
    %c0_9 = arith.constant 0 : index
    %c0_10 = arith.constant 0 : index
    %11 = vector.load %arg5[%c0_9, %c0_10] : memref<1x128xf32, #tpu.memory_space<vmem>>, vector<1x128xf32>
    %12 = vector.broadcast %11 : vector<1x128xf32> to vector<8x128xf32>
    %13 = arith.addf %10, %12 : vector<8x128xf32>
    %c0_11 = arith.constant 0 : index
    %c0_12 = arith.constant 0 : index
    %14 = vector.load %arg6[%c0_11, %c0_12] : memref<8x128xf32, #tpu.memory_space<vmem>>, vector<8x128xf32>
    tpu.vector_store %arg6[%c0_11, %c0_12], %13 {strides = array<i32>} : memref<8x128xf32, #tpu.memory_space<vmem>>, vector<8x128xf32>,
    return
  }
  func.func @transform_0(%arg0: i32) -> (i32, i32) {
    %c0_i32 = arith.constant 0 : i32
    %c0_i32_0 = arith.constant 0 : i32
    return %arg0, %c0_i32 : i32, i32
  }
  func.func @transform_1(%arg0: i32) -> (i32, i32) {
    %c0_i32 = arith.constant 0 : i32
    %c0_i32_0 = arith.constant 0 : i32
    %c0_i32_1 = arith.constant 0 : i32
    return %c0_i32, %c0_i32_0 : i32, i32
  }
  func.func @transform_2(%arg0: i32) -> (i32, i32) {
    %c0_i32 = arith.constant 0 : i32
    %c0_i32_0 = arith.constant 0 : i32
    %c0_i32_1 = arith.constant 0 : i32
    return %c0_i32, %c0_i32_0 : i32, i32
  }
  func.func @transform_3(%arg0: i32) -> (i32, i32) {
    %c0_i32 = arith.constant 0 : i32
    %c0_i32_0 = arith.constant 0 : i32
    %c0_i32_1 = arith.constant 0 : i32
    return %c0_i32, %c0_i32_0 : i32, i32
  }
  func.func @transform_4(%arg0: i32) -> (i32, i32) {
    %c0_i32 = arith.constant 0 : i32
    %c0_i32_0 = arith.constant 0 : i32
    %c0_i32_1 = arith.constant 0 : i32
    return %c0_i32, %c0_i32_0 : i32, i32
  }
  func.func @transform_5(%arg0: i32) -> (i32, i32) {
    %c0_i32 = arith.constant 0 : i32
    %c0_i32_0 = arith.constant 0 : i32
    return %arg0, %c0_i32 : i32, i32
  }
}

</mosaic_0001>

<llo_original>
// kernel: tpu_custom_call.1
$region0: #{tpu_custom_call.1}
  #allocation0 [shape = 'u32[]', space=smem, size = 0x4, offset = 0x4, fixed_abs, tag = 'smem constant byte address 0x4 - core index']
  #allocation1 [shape = 'u32[144,128]{1,0:T(1,128)}', space=vmem, size = 0x12000, scoped, tag = 'internal scratch']
  %s0 = inlined_call_operand.hbm [shape: bf16[8,64], index: 0, kind: input, shape index: {}]
  %s1 = inlined_call_operand.hbm [shape: bf16[64,256], index: 1, kind: input, shape index: {}]
  %s2 = inlined_call_operand.vmem [shape: f32[1,256], index: 2, kind: input, shape index: {}]
  %s3 = inlined_call_operand.hbm [shape: bf16[256,128], index: 3, kind: input, shape index: {}]
  %s4 = inlined_call_operand.vmem [shape: f32[1,128], index: 4, kind: input, shape index: {}]
  %s5 = inlined_call_operand.hbm [shape: f32[8,128], index: 5, kind: output, shape index: {}]
  %s6 = sld [smem:[#allocation0]]
  $region42: #{tpu_custom_call.1} parent=0
    _
  %s8 = ssub.s32 1, %s6
  %s9 = scalar_select 0, %s8, %s6
  $region1: #{tpu_custom_call.1} parent=0
    #allocation2 [shape = 'u8[2048]{0}', space=vmem, size = 0x800, scoped, tag = 'input window, operand 0, single buffered']
    #allocation3 [shape = 's32[1]{0}', space=sflag, size = 0x4, scoped, tag = 'scoped memory for tpu_custom_call.1']
    #allocation4 [shape = 's32[1]{0}', space=sflag, size = 0x4, scoped, tag = 'scoped memory for tpu_custom_call.1']
    #allocation5 [shape = 'u8[32768]{0}', space=vmem, size = 0x8000, scoped, tag = 'input window, operand 1, single buffered']
    #allocation6 [shape = 's32[1]{0}', space=sflag, size = 0x4, scoped, tag = 'scoped memory for tpu_custom_call.1']
    #allocation7 [shape = 'u8[65536]{0}', space=vmem, size = 0x10000, scoped, tag = 'input window, operand 3, single buffered']
    #allocation8 [shape = 'u8[4096]{0}', space=vmem, size = 0x1000, scoped, tag = 'output window, operand 0, single buffered']
    %10 = vsyncpa [#allocation3], 0
    %11 = vsyncpa [#allocation6], 0
    %12 = vsyncpa [#allocation4], 0
    // Predicated region
    $region2: #{tpu_custom_call.1} parent=1 // pred_check
      _
    $region3: #{tpu_custom_call.1} parent=1 // pred_check_branch
      %14 = sbr.rel (0) target = $region5
    $region4: #{tpu_custom_call.1} parent=1 // pred_region
      %s16 = ssub.s32 64, 64
      %17 = vsyncadd [#allocation3], %s16
      %s19 = sshll.u32 [#allocation2], 4
      %s20 = int_to_ptr.vmem [resolvable:$true] %s19
      %22 = dma.hbm_to_vmem [thread:$0]  %s0, 64, %s20, [#allocation3]
    $region5: #{tpu_custom_call.1} parent=1 // pred_fallthru
      _
    // Predicated region
    $region6: #{tpu_custom_call.1} parent=1 // pred_check
      _
    $region7: #{tpu_custom_call.1} parent=1 // pred_check_branch
      %24 = sbr.rel (0) target = $region9
    $region8: #{tpu_custom_call.1} parent=1 // pred_region
      %s26 = ssub.s32 1024, 1024
      %27 = vsyncadd [#allocation6], %s26
      %s28 = sshll.u32 [#allocation5], 4
      %s29 = int_to_ptr.vmem [resolvable:$true] %s28
      %34 = dma.hbm_to_vmem [thread:$0]  %s1, 1024, %s29, [#allocation6], 128, 128, 8
    $region9: #{tpu_custom_call.1} parent=1 // pred_fallthru
      _
    // Predicated region
    $region10: #{tpu_custom_call.1} parent=1 // pred_check
      _
    $region11: #{tpu_custom_call.1} parent=1 // pred_check_branch
      %36 = sbr.rel (0) target = $region13
    $region12: #{tpu_custom_call.1} parent=1 // pred_region
      _
    $region13: #{tpu_custom_call.1} parent=1 // pred_fallthru
      _
    // Predicated region
    $region14: #{tpu_custom_call.1} parent=1 // pred_check
      _
    $region15: #{tpu_custom_call.1} parent=1 // pred_check_branch
      %38 = sbr.rel (0) target = $region17
    $region16: #{tpu_custom_call.1} parent=1 // pred_region
      %s40 = ssub.s32 2048, 2048
      %41 = vsyncadd [#allocation6], %s40
      %s42 = sshll.u32 [#allocation7], 4
      %s43 = int_to_ptr.vmem [resolvable:$true] %s42
      %48 = dma.hbm_to_vmem [thread:$0]  %s3, 2048, %s43, [#allocation6], 64, 64, 4
    $region17: #{tpu_custom_call.1} parent=1 // pred_fallthru
      _
    // Predicated region
    $region18: #{tpu_custom_call.1} parent=1 // pred_check
      _
    $region19: #{tpu_custom_call.1} parent=1 // pred_check_branch
      %50 = sbr.rel (0) target = $region21
    $region20: #{tpu_custom_call.1} parent=1 // pred_region
      _
    $region21: #{tpu_custom_call.1} parent=1 // pred_fallthru
      _
    // Predicated region
    $region22: #{tpu_custom_call.1} parent=1 // pred_check
      _
    $region23: #{tpu_custom_call.1} parent=1 // pred_check_branch
      %52 = sbr.rel (0) target = $region25
    $region24: #{tpu_custom_call.1} parent=1 // pred_region
      %53 = dma.done [#allocation3], 64
    $region25: #{tpu_custom_call.1} parent=1 // pred_fallthru
      _
    // Predicated region
    $region26: #{tpu_custom_call.1} parent=1 // pred_check
      _
    $region27: #{tpu_custom_call.1} parent=1 // pred_check_branch
      %55 = sbr.rel (0) target = $region29
    $region28: #{tpu_custom_call.1} parent=1 // pred_region
      %56 = dma.done [#allocation6], 1024
    $region29: #{tpu_custom_call.1} parent=1 // pred_fallthru
      _
    // Predicated region
    $region30: #{tpu_custom_call.1} parent=1 // pred_check
      _
    $region31: #{tpu_custom_call.1} parent=1 // pred_check_branch
      %58 = sbr.rel (0) target = $region33
    $region32: #{tpu_custom_call.1} parent=1 // pred_region
      %59 = dma.done [#allocation6], 2048
    $region33: #{tpu_custom_call.1} parent=1 // pred_fallthru
      _
    %v61 = vld [vmem:[#allocation2] sm:$0xf]
    %v62 = vld [vmem:[#allocation5] sm:$0xff]
    %v63 = vld [vmem:[#allocation5 + $0x8] sm:$0xff]
    %v64 = vld [vmem:[#allocation5 + $0x10] sm:$0xff]
    %v65 = vld [vmem:[#allocation5 + $0x18] sm:$0xff]
    %v66 = vld [vmem:[#allocation5 + $0x20] sm:$0xff]
    %v67 = vld [vmem:[#allocation5 + $0x28] sm:$0xff]
    %v68 = vld [vmem:[#allocation5 + $0x30] sm:$0xff]
    %v69 = vld [vmem:[#allocation5 + $0x38] sm:$0xff]
    %v70 = vld [vmem:[%s2] sm:$0x3]
    %v72 = vlaneseq
    %v73 = vshrl.u32 %v72, 7
    %v74 = vsub.s32 0, %v73
    %v75 = vrot.slane %v70, %v74
    %v76 = vlaneseq
    %v77 = vshrl.u32 %v76, 7
    %v78 = vsub.s32 1, %v77
    %v79 = vrot.slane %v70, %v78
    %v90 = vunpack.c.l.b16 %v62
    %v91 = vunpack.c.h.b16 %v62
    %v92 = vunpack.c.l.b16 %v63
    %v93 = vunpack.c.h.b16 %v63
    %v94 = vunpack.c.l.b16 %v64
    %v95 = vunpack.c.h.b16 %v64
    %v96 = vunpack.c.l.b16 %v65
    %v97 = vunpack.c.h.b16 %v65
    %v98 = vunpack.c.l.b16 %v66
    %v99 = vunpack.c.h.b16 %v66
    %v100 = vunpack.c.l.b16 %v67
    %v101 = vunpack.c.h.b16 %v67
    %v102 = vunpack.c.l.b16 %v68
    %v103 = vunpack.c.h.b16 %v68
    %v104 = vunpack.c.l.b16 %v69
    %v105 = vunpack.c.h.b16 %v69
    %v106 = vpack.c.b16 %v92, %v90
    %v107 = vpack.c.b16 %v93, %v91
    %v108 = vpack.c.b16 %v96, %v94
    %v109 = vpack.c.b16 %v97, %v95
    %v110 = vpack.c.b16 %v100, %v98
    %v111 = vpack.c.b16 %v101, %v99
    %v112 = vpack.c.b16 %v104, %v102
    %v113 = vpack.c.b16 %v105, %v103
    %vm122 = vcmask 523264
    %v124 = vsel %vm122, %v61, 0
    %126 = vmatprep.subr.bf16.mxu0 0
    %127 = vmatpush1.bf16.msra.mxu0 0
    %128 = vmatprep.subr.bf16.mxu0 0
    %129 = vmatpush1.bf16.msra.mxu0 0
    %130 = vmatprep.subr.bf16.mxu0 0
    %131 = vmatpush1.bf16.msra.mxu0 0
    %132 = vmatprep.subr.bf16.mxu0 0
    %133 = vmatpush1.bf16.msra.mxu0 0
    %134 = vmatprep.subr.bf16.mxu0 %v113
    %135 = vmatpush1.bf16.msra.mxu0 %v112
    %136 = vmatprep.subr.bf16.mxu0 %v111
    %137 = vmatpush1.bf16.msra.mxu0 %v110
    %138 = vmatprep.subr.bf16.mxu0 %v109
    %139 = vmatpush1.bf16.msra.mxu0 %v108
    %140 = vmatprep.subr.bf16.mxu0 %v107
    %141 = vmatpush1.bf16.msra.mxu0 %v106
    %142 = vmatprep.subr.bf16.mxu0 0
    %143 = vmatpush2.bf16.msra.mxu0 0
    %144 = vmatprep.subr.bf16.mxu0 0
    %145 = vmatpush2.bf16.msra.mxu0 0
    %146 = vmatprep.subr.bf16.mxu0 0
    %147 = vmatpush2.bf16.msra.mxu0 0
    %148 = vmatprep.subr.bf16.mxu0 0
    %149 = vmatpush2.bf16.msra.mxu0 0
    %150 = vmatprep.subr.bf16.mxu0 0
    %151 = vmatpush2.bf16.msra.mxu0 0
    %152 = vmatprep.subr.bf16.mxu0 0
    %153 = vmatpush2.bf16.msra.mxu0 0
    %154 = vmatprep.subr.bf16.mxu0 0
    %155 = vmatpush2.bf16.msra.mxu0 0
    %156 = vmatprep.subr.bf16.mxu0 0
    %157 = vmatpush2.bf16.msra.mxu0 0
    %158 = vmatprep.mubr.bf16.mxu0 0
    %159 = vmatmul.mubr.bf16.gmra.mxu0 %v124
    %v160 = vpop.f32.mrf.mxu0
    %v161 = vadd.f32 %v75, %v160
    %v162 = vpop.f32.mrf.mxu0
    %v163 = vadd.f32 %v79, %v162
    %v164 = vpop.f32.mrf.mxu0
    %v165 = vpop.f32.mrf.mxu0
    %166 = vdwg.mxu0
    %v167 = vmax.f32 %v161, 0.0
    %v168 = vmax.f32 %v163, 0.0
    %v169 = vpack.c.bf16 %v167, %v167
    %v170 = vpack.c.bf16 %v168, %v168
    %v171 = vld [vmem:[#allocation7] sm:$0xf]
    %v172 = vld [vmem:[#allocation7 + $0x4] sm:$0xf]
    %v173 = vld [vmem:[#allocation7 + $0x8] sm:$0xf]
    %v174 = vld [vmem:[#allocation7 + $0xc] sm:$0xf]
    %v175 = vld [vmem:[#allocation7 + $0x10] sm:$0xf]
    %v176 = vld [vmem:[#allocation7 + $0x14] sm:$0xf]
    %v177 = vld [vmem:[#allocation7 + $0x18] sm:$0xf]
    %v178 = vld [vmem:[#allocation7 + $0x1c] sm:$0xf]
    %v179 = vld [vmem:[#allocation7 + $0x20] sm:$0xf]
    %v180 = vld [vmem:[#allocation7 + $0x24] sm:$0xf]
    %v181 = vld [vmem:[#allocation7 + $0x28] sm:$0xf]
    %v182 = vld [vmem:[#allocation7 + $0x2c] sm:$0xf]
    %v183 = vld [vmem:[#allocation7 + $0x30] sm:$0xf]
    %v184 = vld [vmem:[#allocation7 + $0x34] sm:$0xf]
    %v185 = vld [vmem:[#allocation7 + $0x38] sm:$0xf]
    %v186 = vld [vmem:[#allocation7 + $0x3c] sm:$0xf]
    %v187 = vld [vmem:[#allocation7 + $0x40] sm:$0xf]
    %v188 = vld [vmem:[#allocation7 + $0x44] sm:$0xf]
    %v189 = vld [vmem:[#allocation7 + $0x48] sm:$0xf]
    %v190 = vld [vmem:[#allocation7 + $0x4c] sm:$0xf]
    %v191 = vld [vmem:[#allocation7 + $0x50] sm:$0xf]
    %v192 = vld [vmem:[#allocation7 + $0x54] sm:$0xf]
    %v193 = vld [vmem:[#allocation7 + $0x58] sm:$0xf]
    %v194 = vld [vmem:[#allocation7 + $0x5c] sm:$0xf]
    %v195 = vld [vmem:[#allocation7 + $0x60] sm:$0xf]
    %v196 = vld [vmem:[#allocation7 + $0x64] sm:$0xf]
    %v197 = vld [vmem:[#allocation7 + $0x68] sm:$0xf]
    %v198 = vld [vmem:[#allocation7 + $0x6c] sm:$0xf]
    %v199 = vld [vmem:[#allocation7 + $0x70] sm:$0xf]
    %v200 = vld [vmem:[#allocation7 + $0x74] sm:$0xf]
    %v201 = vld [vmem:[#allocation7 + $0x78] sm:$0xf]
    %v202 = vld [vmem:[#allocation7 + $0x7c] sm:$0xf]
    %v203 = vld [vmem:[%s4] sm:$0x1]
    %v205 = vlaneseq
    %v206 = vshrl.u32 %v205, 7
    %v207 = vsub.s32 0, %v206
    %v208 = vrot.slane %v203, %v207
    %v242 = vunpack.c.l.b16 %v171
    %v243 = vunpack.c.l.b16 %v172
    %v244 = vunpack.c.l.b16 %v173
    %v245 = vunpack.c.l.b16 %v174
    %v246 = vunpack.c.l.b16 %v175
    %v247 = vunpack.c.l.b16 %v176
    %v248 = vunpack.c.l.b16 %v177
    %v249 = vunpack.c.l.b16 %v178
    %v250 = vunpack.c.l.b16 %v179
    %v251 = vunpack.c.l.b16 %v180
    %v252 = vunpack.c.l.b16 %v181
    %v253 = vunpack.c.l.b16 %v182
    %v254 = vunpack.c.l.b16 %v183
    %v255 = vunpack.c.l.b16 %v184
    %v256 = vunpack.c.l.b16 %v185
    %v257 = vunpack.c.l.b16 %v186
    %v258 = vunpack.c.l.b16 %v187
    %v259 = vunpack.c.l.b16 %v188
    %v260 = vunpack.c.l.b16 %v189
    %v261 = vunpack.c.l.b16 %v190
    %v262 = vunpack.c.l.b16 %v191
    %v263 = vunpack.c.l.b16 %v192
    %v264 = vunpack.c.l.b16 %v193
    %v265 = vunpack.c.l.b16 %v194
    %v266 = vunpack.c.l.b16 %v195
    %v267 = vunpack.c.l.b16 %v196
    %v268 = vunpack.c.l.b16 %v197
    %v269 = vunpack.c.l.b16 %v198
    %v270 = vunpack.c.l.b16 %v199
    %v271 = vunpack.c.l.b16 %v200
    %v272 = vunpack.c.l.b16 %v201
    %v273 = vunpack.c.l.b16 %v202
    %v274 = vpack.c.b16 %v243, %v242
    %v275 = vpack.c.b16 %v245, %v244
    %v276 = vpack.c.b16 %v247, %v246
    %v277 = vpack.c.b16 %v249, %v248
    %v278 = vpack.c.b16 %v251, %v250
    %v279 = vpack.c.b16 %v253, %v252
    %v280 = vpack.c.b16 %v255, %v254
    %v281 = vpack.c.b16 %v257, %v256
    %v282 = vpack.c.b16 %v259, %v258
    %v283 = vpack.c.b16 %v261, %v260
    %v284 = vpack.c.b16 %v263, %v262
    %v285 = vpack.c.b16 %v265, %v264
    %v286 = vpack.c.b16 %v267, %v266
    %v287 = vpack.c.b16 %v269, %v268
    %v288 = vpack.c.b16 %v271, %v270
    %v289 = vpack.c.b16 %v273, %v272
    %306 = vmatprep.subr.bf16.mxu0 0
    %307 = vmatpush1.bf16.msra.mxu0 %v281
    %308 = vmatprep.subr.bf16.mxu0 0
    %309 = vmatpush1.bf16.msra.mxu0 %v280
    %310 = vmatprep.subr.bf16.mxu0 0
    %311 = vmatpush1.bf16.msra.mxu0 %v279
    %312 = vmatprep.subr.bf16.mxu0 0
    %313 = vmatpush1.bf16.msra.mxu0 %v278
    %314 = vmatprep.subr.bf16.mxu0 0
    %315 = vmatpush1.bf16.msra.mxu0 %v277
    %316 = vmatprep.subr.bf16.mxu0 0
    %317 = vmatpush1.bf16.msra.mxu0 %v276
    %318 = vmatprep.subr.bf16.mxu0 0
    %319 = vmatpush1.bf16.msra.mxu0 %v275
    %320 = vmatprep.subr.bf16.mxu0 0
    %321 = vmatpush1.bf16.msra.mxu0 %v274
    %322 = vmatprep.subr.bf16.mxu0 0
    %323 = vmatpush2.bf16.msra.mxu0 %v289
    %324 = vmatprep.subr.bf16.mxu0 0
    %325 = vmatpush2.bf16.msra.mxu0 %v288
    %326 = vmatprep.subr.bf16.mxu0 0
    %327 = vmatpush2.bf16.msra.mxu0 %v287
    %328 = vmatprep.subr.bf16.mxu0 0
    %329 = vmatpush2.bf16.msra.mxu0 %v286
    %330 = vmatprep.subr.bf16.mxu0 0
    %331 = vmatpush2.bf16.msra.mxu0 %v285
    %332 = vmatprep.subr.bf16.mxu0 0
    %333 = vmatpush2.bf16.msra.mxu0 %v284
    %334 = vmatprep.subr.bf16.mxu0 0
    %335 = vmatpush2.bf16.msra.mxu0 %v283
    %336 = vmatprep.subr.bf16.mxu0 0
    %337 = vmatpush2.bf16.msra.mxu0 %v282
    %338 = vmatprep.mubr.bf16.mxu0 %v170
    %339 = vmatmul.mubr.bf16.gmra.mxu0 %v169
    %v340 = vpop.f32.mrf.mxu0
    %v341 = vadd.f32 %v208, %v340
    %v342 = vpop.f32.mrf.mxu0
    %v343 = vpop.f32.mrf.mxu0
    %v344 = vpop.f32.mrf.mxu0
    %345 = vdwg.mxu0
    %346 = vst [vmem:[#allocation8] sm:$0xff] %v341
    // Predicated region
    $region34: #{tpu_custom_call.1} parent=1 // pred_check
      _
    $region35: #{tpu_custom_call.1} parent=1 // pred_check_branch
      %348 = sbr.rel (0) target = $region37
    $region36: #{tpu_custom_call.1} parent=1 // pred_region
      %s350 = ssub.s32 128, 128
      %351 = vsyncadd [#allocation4], %s350
      %s353 = sshll.u32 [#allocation8], 4
      %s354 = int_to_ptr.vmem [resolvable:$true] %s353
      %356 = dma.vmem_to_hbm [thread:$0]  %s354, 128, %s5, [#allocation4]
    $region37: #{tpu_custom_call.1} parent=1 // pred_fallthru
      _
    // Predicated region
    $region38: #{tpu_custom_call.1} parent=1 // pred_check
      _
    $region39: #{tpu_custom_call.1} parent=1 // pred_check_branch
      %358 = sbr.rel (0) target = $region41
    $region40: #{tpu_custom_call.1} parent=1 // pred_region
      %359 = dma.done [#allocation4], 128
    $region41: #{tpu_custom_call.1} parent=1 // pred_fallthru
      _
    %360 = vsyncpa [#allocation3], 1
    %361 = vsyncpa [#allocation6], 1
    %362 = vsyncpa [#allocation4], 1

</llo_original>
